<compile_context>
chip_gen: v6e
topology: v6e:2x2x1
jax: 0.10.0
libtpu: 0.0.40
codegen_flags: <defaults>
</compile_context>

<pallas_src>
import functools

import jax
import jax.numpy as jnp
from jax import lax
from jax.experimental import pallas as pl
from jax.experimental.pallas import tpu as pltpu


_LANE = 128


def _round_up(v, m):
    return (v + m - 1) // m * m


def _vmem_config():
    """Return (vmem_limit_bytes, data budget for tile sizing) per chip generation."""
    phys = 128 * 1024 * 1024
    try:
        info = pltpu.get_tpu_info()
        cap = getattr(info, "vmem_capacity_bytes", None)
        if cap:
            phys = int(cap)
    except Exception:
        pass
    if phys >= 128 * 1024 * 1024:          # v5e / v6e: 128 MiB physical VMEM
        return 96 * 1024 * 1024, 48 * 1024 * 1024
    return 32 * 1024 * 1024, 16 * 1024 * 1024   # v7x: 64 MiB per TensorCore


def _choose_tile_l(l_out, kdp, cp, c_out, in_b, out_b, budget):
    """Largest L tile (multiple of 128 lanes) whose working set fits the budget."""
    # TODO(synk): on v7x, when kdp*cp grows large, add a K grid axis with an f32
    # accumulator instead of letting the L tile shrink.
    fixed = 2 * kdp * cp * in_b + 16 * cp * 4            # dbl-buffered W + small vectors
    per_row = 2 * kdp * in_b + 2 * c_out * out_b + 3 * cp * 4
    tl = max(budget - fixed, 0) // per_row
    tl = int(max(_LANE, (tl // _LANE) * _LANE))
    return min(tl, _round_up(l_out, _LANE))


# ---------------------------- kernels ----------------------------

def _gemm_stats_kernel(a_ref, w_ref, b_ref, stats_ref):
    """Accumulate per-channel [sum; sum_sq] of (A @ W + b) for this L tile."""
    y = jnp.dot(a_ref[0], w_ref[...], preferred_element_type=jnp.float32)
    y = y + b_ref[...]
    s1 = jnp.sum(y, axis=0, keepdims=True)
    s2 = jnp.sum(y * y, axis=0, keepdims=True)

    @pl.when(pl.program_id(1) == 0)
    def _():
        stats_ref[...] = jnp.zeros_like(stats_ref)

    stats_ref[...] += jnp.concatenate([s1, s2], axis=0)[None]


def _gemm_stats_store_kernel(a_ref, w_ref, b_ref, y_ref, stats_ref, *, c_out):
    """Same as above, but also streams the conv output, transposed, in y dtype."""
    y = jnp.dot(a_ref[0], w_ref[...], preferred_element_type=jnp.float32)
    y = y + b_ref[...]
    s1 = jnp.sum(y, axis=0, keepdims=True)
    s2 = jnp.sum(y * y, axis=0, keepdims=True)

    @pl.when(pl.program_id(1) == 0)
    def _():
        stats_ref[...] = jnp.zeros_like(stats_ref)

    stats_ref[...] += jnp.concatenate([s1, s2], axis=0)[None]
    y_ref[0] = y.T[:c_out].astype(y_ref.dtype)          # (c_out, tl) lane-dense store


def _gemm_affine_lrelu_kernel(a_ref, w_ref, scale_ref, shift_ref, o_ref, *,
                              leaky_rate, c_out):
    """out = LeakyReLU((A @ W) * scale + shift), written transposed (C_out, tl)."""
    y = jnp.dot(a_ref[0], w_ref[...], preferred_element_type=jnp.float32)
    z = y * scale_ref[...] + shift_ref[...]
    z = jnp.where(z >= 0, z, leaky_rate * z)
    o_ref[0] = z.T[:c_out].astype(o_ref.dtype)


def _affine_lrelu_kernel(y_ref, scale_ref, shift_ref, o_ref, *, leaky_rate):
    """out = LeakyReLU(y * scale + shift) on already-transposed (C_out, tl) tiles."""
    z = y_ref[0].astype(jnp.float32) * scale_ref[...] + shift_ref[...]
    o_ref[0] = jnp.where(z >= 0, z, leaky_rate * z).astype(o_ref.dtype)


# ---------------------------- wrapper ----------------------------

def cnn1d_block(x, weight, bias, gamma, beta, *, stride=1, padding=0,
                dilation=1, leaky_rate=0.2, normalize=True, eps=1e-5,
                tile_l=None, bn_mode=None):
    """Forward pass of CNN1dblock.  x: (N, C_in, L) -> (N, C_out, L_out)."""
    N, C_in, L = x.shape
    C_out, _, K = weight.shape
    L_out = (L + 2 * padding - dilation * (K - 1) - 1) // stride + 1
    assert L_out > 0

    # --- glue: im2col (pure data reshuffling, no compute) ---
    # TODO(synk): for stride=1/dilation=1, move im2col into the kernel (K shifted
    # matmuls over an L-tiled x) so activation HBM traffic is not duplicated K-fold.
    xp = jnp.pad(x, ((0, 0), (0, 0), (padding, padding)))
    idx = jnp.arange(L_out)[:, None] * stride + jnp.arange(K)[None, :] * dilation
    patches = jnp.take(xp, idx, axis=2)                        # (N, C_in, L_out, K)
    a = patches.transpose(0, 2, 1, 3).reshape(N, L_out, C_in * K)
    Kd = C_in * K

    cdt = x.dtype                       # MXU input dtype (bf16 stays bf16)
    out_dt = x.dtype
    in_b = jnp.dtype(cdt).itemsize
    out_b = jnp.dtype(out_dt).itemsize

    Kdp = _round_up(Kd, _LANE)          # lane-dense contraction dim
    Cp = _round_up(C_out, _LANE)        # lane-dense GEMM width (VMEM only)

    vmem_limit, vmem_budget = _vmem_config()
    if tile_l is not None:
        tl = min(max(_LANE, _round_up(int(tile_l), _LANE)), _round_up(L_out, _LANE))
    else:
        tl = _choose_tile_l(L_out, Kdp, Cp, C_out, in_b, out_b, vmem_budget)
    nj = pl.cdiv(L_out, tl)
    Lp = nj * tl
    pad_rows = N * (Lp - L_out)         # zero rows of A; their conv output == bias

    a_p = jnp.pad(a.astype(cdt), ((0, 0), (0, Lp - L_out), (0, Kdp - Kd)))
    w_p = jnp.pad(weight.reshape(C_out, Kd).T.astype(cdt),
                  ((0, Kdp - Kd), (0, Cp - C_out)))
    b_row = jnp.pad(bias.astype(jnp.float32)[None, :], ((0, 0), (0, Cp - C_out)))

    def cparams(sem):
        return pltpu.CompilerParams(dimension_semantics=sem,
                                    vmem_limit_bytes=vmem_limit)

    a_spec = pl.BlockSpec((1, tl, Kdp), lambda n, j: (n, j, 0))
    w_spec = pl.BlockSpec((Kdp, Cp), lambda n, j: (0, 0))
    row_spec = pl.BlockSpec((1, Cp), lambda n, j: (0, 0))
    out_spec = pl.BlockSpec((1, C_out, tl), lambda n, j: (n, 0, j))
    stats_spec = pl.BlockSpec((1, 2, Cp), lambda n, j: (n, 0, 0))

    gemm_flops = int(2 * N * Lp * Kdp * Cp)
    a_bytes = int(a_p.size) * in_b
    w_bytes = int(w_p.size) * in_b
    o_bytes = N * C_out * Lp * out_b
    stats_bytes = N * 2 * Cp * 4

    if not normalize:
        scale1 = jnp.pad(jnp.ones((1, C_out), jnp.float32), ((0, 0), (0, Cp - C_out)))
        out = pl.pallas_call(
            functools.partial(_gemm_affine_lrelu_kernel,
                              leaky_rate=leaky_rate, c_out=C_out),
            out_shape=jax.ShapeDtypeStruct((N, C_out, Lp), out_dt),
            grid=(N, nj),
            in_specs=[a_spec, w_spec, row_spec, row_spec],
            out_specs=out_spec,
            compiler_params=cparams(("parallel", "parallel")),
            cost_estimate=pl.CostEstimate(flops=gemm_flops, transcendentals=0,
                                          bytes_accessed=a_bytes + w_bytes + o_bytes),
        )(a_p, w_p, scale1, b_row)
        return out if Lp == L_out else out[:, :, :L_out]

    # ------------------------- normalize=True -------------------------
    if bn_mode is None:
        # Stream the compact transposed conv output iff its write+read is cheaper
        # than re-reading the im2col activations for a second GEMM pass.
        bn_mode = "stream" if 2 * C_out * out_b <= Kdp * in_b else "recompute"
    assert bn_mode in ("stream", "recompute")

    M = N * L_out
    if bn_mode == "stream":
        y2d, stats = pl.pallas_call(
            functools.partial(_gemm_stats_store_kernel, c_out=C_out),
            out_shape=(jax.ShapeDtypeStruct((N, C_out, Lp), out_dt),
                       jax.ShapeDtypeStruct((N, 2, Cp), jnp.float32)),
            grid=(N, nj),
            in_specs=[a_spec, w_spec, row_spec],
            out_specs=(out_spec, stats_spec),
            compiler_params=cparams(("parallel", "arbitrary")),
            cost_estimate=pl.CostEstimate(
                flops=gemm_flops, transcendentals=0,
                bytes_accessed=a_bytes + w_bytes + o_bytes + stats_bytes),
        )(a_p, w_p, b_row)
    else:
        stats = pl.pallas_call(
            _gemm_stats_kernel,
            out_shape=jax.ShapeDtypeStruct((N, 2, Cp), jnp.float32),
            grid=(N, nj),
            in_specs=[a_spec, w_spec, row_spec],
            out_specs=stats_spec,
            compiler_params=cparams(("parallel", "arbitrary")),
            cost_estimate=pl.CostEstimate(
                flops=gemm_flops, transcendentals=0,
                bytes_accessed=a_bytes + w_bytes + stats_bytes),
        )(a_p, w_p, b_row)

    # --- tiny JAX glue: global batch stats -> per-channel scale / shift ---
    bias32 = bias.astype(jnp.float32)
    s = stats.sum(axis=0)[:, :C_out]                 # sum the per-batch partials
    s1 = s[0] - pad_rows * bias32                    # remove zero-row (== bias) padding
    s2 = s[1] - pad_rows * bias32 * bias32
    mean = s1 / M
    var = jnp.maximum(s2 / M - mean * mean, 0.0)     # biased (training) var, clamped
    scale_c = gamma.astype(jnp.float32) * lax.rsqrt(var + eps)
    shift_c = beta.astype(jnp.float32) - mean * scale_c

    if bn_mode == "stream":
        col_spec = pl.BlockSpec((C_out, 1), lambda n, j: (0, 0))
        out = pl.pallas_call(
            functools.partial(_affine_lrelu_kernel, leaky_rate=leaky_rate),
            out_shape=jax.ShapeDtypeStruct((N, C_out, Lp), out_dt),
            grid=(N, nj),
            in_specs=[out_spec, col_spec, col_spec],
            out_specs=out_spec,
            compiler_params=cparams(("parallel", "parallel")),
            cost_estimate=pl.CostEstimate(flops=int(2 * N * Lp * C_out),
                                          transcendentals=0,
                                          bytes_accessed=2 * o_bytes),
        )(y2d, scale_c[:, None], shift_c[:, None])
    else:
        scale_p = jnp.pad(scale_c[None, :], ((0, 0), (0, Cp - C_out)))
        shift_p = jnp.pad((shift_c + bias32 * scale_c)[None, :],
                          ((0, 0), (0, Cp - C_out)))    # fold bias into the shift
        out = pl.pallas_call(
            functools.partial(_gemm_affine_lrelu_kernel,
                              leaky_rate=leaky_rate, c_out=C_out),
            out_shape=jax.ShapeDtypeStruct((N, C_out, Lp), out_dt),
            grid=(N, nj),
            in_specs=[a_spec, w_spec, row_spec, row_spec],
            out_specs=out_spec,
            compiler_params=cparams(("parallel", "parallel")),
            cost_estimate=pl.CostEstimate(flops=gemm_flops, transcendentals=0,
                                          bytes_accessed=a_bytes + w_bytes + o_bytes),
        )(a_p, w_p, scale_p, shift_p)

    return out if Lp == L_out else out[:, :, :L_out]


# ---------------------------- reference ----------------------------

def _reference(x, weight, bias, gamma, beta, *, stride, padding, dilation,
               leaky_rate, normalize, eps=1e-5):
    """Pure-JAX reference matching PyTorch semantics (training-mode BN)."""
    y = lax.conv_general_dilated(
        x, weight, window_strides=(stride,), padding=[(padding, padding)],
        rhs_dilation=(dilation,), dimension_numbers=("NCH", "OIH", "NCH"))
    y = y + bias[None, :, None]
    if normalize:
        mean = jnp.mean(y, axis=(0, 2), keepdims=True)
        var = jnp.mean((y - mean) ** 2, axis=(0, 2), keepdims=True)
        y = (y - mean) * lax.rsqrt(var + eps) * gamma[None, :, None] \
            + beta[None, :, None]
    return jnp.where(y >= 0, y, leaky_rate * y)


if __name__ == "__main__":
    key = jax.random.PRNGKey(0)
    kx, kw, kb, kg, kbe, kx2 = jax.random.split(key, 6)

    N, C_in, C_out, K = 2, 4, 8, 3
    leaky_rate = 0.2

    fan_in = C_in * K
    bound = 1.0 / (fan_in ** 0.5)
    weight = jax.random.uniform(kw, (C_out, C_in, K), jnp.float32, -bound, bound)
    bias = jax.random.uniform(kb, (C_out,), jnp.float32, -bound, bound)
    gamma = 1.0 + 0.1 * jax.random.normal(kg, (C_out,), jnp.float32)
    beta = 0.1 * jax.random.normal(kbe, (C_out,), jnp.float32)

    x_small = jax.random.normal(kx, (N, C_in, 16), jnp.float32)
    x_long = jax.random.normal(kx2, (N, C_in, 300), jnp.float32)

    def check(name, x, *, stride=1, padding=1, dilation=1, normalize=True, **kw):
        out = cnn1d_block(x, weight, bias, gamma, beta, stride=stride,
                          padding=padding, dilation=dilation,
                          leaky_rate=leaky_rate, normalize=normalize, **kw)
        out = jax.block_until_ready(out)
        ref = _reference(x, weight, bias, gamma, beta, stride=stride,
                         padding=padding, dilation=dilation,
                         leaky_rate=leaky_rate, normalize=normalize)
        assert out.shape == ref.shape, f"{name}: {out.shape} vs {ref.shape}"
        assert jnp.allclose(out, ref, atol=5e-4, rtol=5e-4), f"{name} mismatch"

    # 1) normalize=True, auto BN mode (streams compact transposed conv output).
    check("bn_auto", x_small)
    # 2) normalize=True, forced recompute mode (no intermediate materialized).
    check("bn_recompute", x_small, bn_mode="recompute")
    # 3) multi-L-tile global stats + padded-row bias correction (forced 128 tiles).
    check("bn_multitile", x_long, tile_l=128)
    # 4) normalize=False single-pass GEMM + LeakyReLU.
    check("no_bn", x_small, normalize=False)
    # 5) strided conv geometry through the same kernels.
    check("strided", x_small, stride=2, padding=1)

    print("KERNEL_OK")
</pallas_src>

<mosaic_0001>
module attributes {stable_mosaic.version = 11 : i64} {
  func.func @_gemm_stats_store_kernel(%arg0: i32, %arg1: i32, %arg2: memref<1x128x128xf32, #tpu.memory_space<vmem>>, %arg3: memref<128x128xf32, #tpu.memory_space<vmem>>, %arg4: memref<1x128xf32, #tpu.memory_space<vmem>>, %arg5: memref<1x8x128xf32, #tpu.memory_space<vmem>>, %arg6: memref<1x2x128xf32, #tpu.memory_space<vmem>>) attributes {dimension_semantics = [#tpu.dimension_semantics<parallel>, #tpu.dimension_semantics<arbitrary>], iteration_bounds = array<i64: 2, 1>, scalar_prefetch = 0 : i64, scratch_operands = 0 : i64, tpu.core_type = #tpu.core_type<tc>, window_params = [{transform_indices = @transform_0, window_bounds = array<i64: 1, 128, 128>}, {pipeline_mode = #tpu.pipeline_mode<synchronous>, transform_indices = @transform_1, window_bounds = array<i64: 128, 128>}, {pipeline_mode = #tpu.pipeline_mode<synchronous>, transform_indices = @transform_2, window_bounds = array<i64: 1, 128>}, {transform_indices = @transform_3, window_bounds = array<i64: 1, 8, 128>}, {transform_indices = @transform_4, window_bounds = array<i64: 1, 2, 128>}]} {
    %c0 = arith.constant 0 : index
    %c0_0 = arith.constant 0 : index
    %c0_1 = arith.constant 0 : index
    %0 = vector.load %arg2[%c0, %c0_0, %c0_1] : memref<1x128x128xf32, #tpu.memory_space<vmem>>, vector<1x128x128xf32>
    %1 = vector.shape_cast %0 : vector<1x128x128xf32> to vector<128x128xf32>
    %c0_2 = arith.constant 0 : index
    %c0_3 = arith.constant 0 : index
    %2 = vector.load %arg3[%c0_2, %c0_3] : memref<128x128xf32, #tpu.memory_space<vmem>>, vector<128x128xf32>
    %cst = arith.constant dense<0.000000e+00> : vector<128x128xf32>
    %3 = tpu.matmul %1, %2, %cst {dimension_numbers = #tpu.dot_dimension_numbers<[1], [0], [0], [1], [0, 0, 1, 1], [], []>} : vector<128x128xf32>, vector<128x128xf32>, vector<128x128xf32> -> vector<128x128xf32>
    %c0_4 = arith.constant 0 : index
    %c0_5 = arith.constant 0 : index
    %4 = vector.load %arg4[%c0_4, %c0_5] : memref<1x128xf32, #tpu.memory_space<vmem>>, vector<1x128xf32>
    %5 = vector.broadcast %4 : vector<1x128xf32> to vector<128x128xf32>
    %6 = arith.addf %3, %5 : vector<128x128xf32>
    %cst_6 = arith.constant dense<0.000000e+00> : vector<128xf32>
    %7 = vector.multi_reduction <add>, %6, %cst_6 [0] : vector<128x128xf32> to vector<128xf32>
    %8 = vector.shape_cast %7 : vector<128xf32> to vector<1x128xf32>
    %9 = arith.mulf %6, %6 : vector<128x128xf32>
    %cst_7 = arith.constant dense<0.000000e+00> : vector<128xf32>
    %10 = vector.multi_reduction <add>, %9, %cst_7 [0] : vector<128x128xf32> to vector<128xf32>
    %11 = vector.shape_cast %10 : vector<128xf32> to vector<1x128xf32>
    %c0_i32 = arith.constant 0 : i32
    %12 = arith.cmpi eq, %arg1, %c0_i32 : i32
    %13 = arith.extui %12 : i1 to i32
    %c0_i32_8 = arith.constant 0 : i32
    %14 = arith.cmpi ne, %13, %c0_i32_8 : i32
    scf.if %14 {
      %cst_18 = arith.constant 0.000000e+00 : f32
      %25 = vector.broadcast %cst_18 : f32 to vector<1x2x128xf32>
      %c0_19 = arith.constant 0 : index
      %c0_20 = arith.constant 0 : index
      %c0_21 = arith.constant 0 : index
      %26 = vector.load %arg6[%c0_19, %c0_20, %c0_21] : memref<1x2x128xf32, #tpu.memory_space<vmem>>, vector<1x2x128xf32>
      tpu.vector_store %arg6[%c0_19, %c0_20, %c0_21], %25 {strides = array<i32>} : memref<1x2x128xf32, #tpu.memory_space<vmem>>, vector<1x2x128xf32>,
    } else {
    }
    %c0_9 = arith.constant 0 : index
    %c0_10 = arith.constant 0 : index
    %c0_11 = arith.constant 0 : index
    %15 = vector.load %arg6[%c0_9, %c0_10, %c0_11] : memref<1x2x128xf32, #tpu.memory_space<vmem>>, vector<1x2x128xf32>
    %16 = tpu.concatenate %8, %11 in 0 : vector<1x128xf32>, vector<1x128xf32> -> vector<2x128xf32>
    %17 = vector.shape_cast %16 : vector<2x128xf32> to vector<1x2x128xf32>
    %18 = arith.addf %15, %17 : vector<1x2x128xf32>
    %c0_12 = arith.constant 0 : index
    %c0_13 = arith.constant 0 : index
    %c0_14 = arith.constant 0 : index
    %19 = vector.load %arg6[%c0_12, %c0_13, %c0_14] : memref<1x2x128xf32, #tpu.memory_space<vmem>>, vector<1x2x128xf32>
    tpu.vector_store %arg6[%c0_12, %c0_13, %c0_14], %18 {strides = array<i32>} : memref<1x2x128xf32, #tpu.memory_space<vmem>>, vector<1x2x128xf32>,
    %20 = tpu.transpose %6, [1, 0] : vector<128x128xf32> -> vector<128x128xf32>
    %21 = vector.extract_strided_slice %20 {offsets = [0, 0], sizes = [8, 128], strides = [1, 1]} : vector<128x128xf32> to vector<8x128xf32>
    %c0_15 = arith.constant 0 : index
    %c0_16 = arith.constant 0 : index
    %c0_17 = arith.constant 0 : index
    %22 = vector.load %arg5[%c0_15, %c0_16, %c0_17] : memref<1x8x128xf32, #tpu.memory_space<vmem>>, vector<1x8x128xf32>
    %23 = vector.shape_cast %22 : vector<1x8x128xf32> to vector<8x128xf32>
    %24 = vector.shape_cast %21 : vector<8x128xf32> to vector<1x8x128xf32>
    tpu.vector_store %arg5[%c0_15, %c0_16, %c0_17], %24 {strides = array<i32>} : memref<1x8x128xf32, #tpu.memory_space<vmem>>, vector<1x8x128xf32>,
    return
  }
  func.func @transform_0(%arg0: i32, %arg1: i32) -> (i32, i32, i32) {
    %c0_i32 = arith.constant 0 : i32
    %c0_i32_0 = arith.constant 0 : i32
    return %arg0, %arg1, %c0_i32 : i32, i32, i32
  }
  func.func @transform_1(%arg0: i32, %arg1: i32) -> (i32, i32) {
    %c0_i32 = arith.constant 0 : i32
    %c0_i32_0 = arith.constant 0 : i32
    %c0_i32_1 = arith.constant 0 : i32
    return %c0_i32, %c0_i32_0 : i32, i32
  }
  func.func @transform_2(%arg0: i32, %arg1: i32) -> (i32, i32) {
    %c0_i32 = arith.constant 0 : i32
    %c0_i32_0 = arith.constant 0 : i32
    %c0_i32_1 = arith.constant 0 : i32
    return %c0_i32, %c0_i32_0 : i32, i32
  }
  func.func @transform_3(%arg0: i32, %arg1: i32) -> (i32, i32, i32) {
    %c0_i32 = arith.constant 0 : i32
    %c0_i32_0 = arith.constant 0 : i32
    return %arg0, %c0_i32, %arg1 : i32, i32, i32
  }
  func.func @transform_4(%arg0: i32, %arg1: i32) -> (i32, i32, i32) {
    %c0_i32 = arith.constant 0 : i32
    %c0_i32_0 = arith.constant 0 : i32
    %c0_i32_1 = arith.constant 0 : i32
    return %arg0, %c0_i32, %c0_i32_0 : i32, i32, i32
  }
}

</mosaic_0001>

<llo_original>
// kernel: tpu_custom_call.1
$region0: #{tpu_custom_call.1}
  #allocation0 [shape = 'u32[]', space=smem, size = 0x4, offset = 0x4, fixed_abs, tag = 'smem constant byte address 0x4 - core index']
  #allocation1 [shape = 'u32[144,128]{1,0:T(1,128)}', space=vmem, size = 0x12000, scoped, tag = 'internal scratch']
  %s0 = inlined_call_operand.hbm [shape: f32[2,128,128], index: 0, kind: input, shape index: {}]
  %s1 = inlined_call_operand.hbm [shape: f32[128,128], index: 1, kind: input, shape index: {}]
  %s2 = inlined_call_operand.vmem [shape: f32[1,128], index: 2, kind: input, shape index: {}]
  %s3 = inlined_call_operand.hbm [shape: f32[2,8,128], index: 3, kind: output, shape index: {0}]
  %s4 = inlined_call_operand.hbm [shape: f32[2,2,128], index: 4, kind: output, shape index: {1}]
  %5 = xla_tuple %s3, %s4
  %s6 = sld [smem:[#allocation0]]
  $region65: #{tpu_custom_call.1} parent=0
    _
  %s8 = ssub.s32 1, %s6
  %s9 = scalar_select 0, %s8, %s6
  $region1: #{tpu_custom_call.1} parent=0
    #allocation2 [shape = 'u8[131072]{0}', space=vmem, size = 0x20000, scoped, tag = 'input window, operand 0']
    #allocation3 [shape = 's32[2]{0}', space=sflag, size = 0x8, scoped, tag = 'scoped memory for tpu_custom_call.1']
    #allocation4 [shape = 's32[2]{0}', space=sflag, size = 0x8, scoped, tag = 'scoped memory for tpu_custom_call.1']
    #allocation5 [shape = 'u8[65536]{0}', space=vmem, size = 0x10000, scoped, tag = 'input window, operand 1, single buffered']
    #allocation6 [shape = 's32[1]{0}', space=sflag, size = 0x4, scoped, tag = 'scoped memory for tpu_custom_call.1']
    #allocation7 [shape = 'u8[8192]{0}', space=vmem, size = 0x2000, scoped, tag = 'output window, operand 0']
    #allocation8 [shape = 'u8[2048]{0}', space=vmem, size = 0x800, scoped, tag = 'output window, operand 1']
    #allocation9 [shape = 's32[2]{0}', space=sflag, size = 0x8, scoped, tag = 'scoped memory for tpu_custom_call.1']
    %10 = vsyncpa [#allocation3], 0
    %s11 = scalar_lea.sflag [#allocation3], 1
    %12 = vsyncpa %s11, 0
    %13 = vsyncpa [#allocation6], 0
    %14 = vsyncpa [#allocation4], 0
    %s15 = scalar_lea.sflag [#allocation4], 1
    %16 = vsyncpa %s15, 0
    %17 = vsyncpa [#allocation9], 0
    %s18 = scalar_lea.sflag [#allocation9], 1
    %19 = vsyncpa %s18, 0
    loop: start=0, step=1, limit=4
    $region2: #{tpu_custom_call.1} parent=1 // loop_pre_header
      _
    $region3: #{tpu_custom_call.1} parent=1 // loop_header
      %s21 = sphi 0, %s25
      %p22 = scmp.ge.s32.totalorder %s21, 4
      %s28 = sphi 0, %s40
      %s29 = sphi 0, %s36
      %s30 = sphi 0, %s28
      %s31 = sphi 0, %s29
      %s32 = sphi 0, %s30
      %s33 = sphi 0, %s31
      %s45 = sphi 0, %s47
      %s48 = sphi 0, %s45
      %s49 = sphi 0, %s48
      %s65 = sphi 0, %s49
      %s69 = sphi 0, %s69
      %s71 = sphi 0, %s69
      %s72 = sphi 0, %s71
      %s86 = sphi 0, %s72
      %s90 = sphi 0, %s90
      %s92 = sphi 0, %s90
      %s93 = sphi 0, %s92
      %s107 = sphi 0, %s93
      %s115 = sphi 0, %s117
      %s118 = sphi 0, %s115
      %s119 = sphi 0, %s118
      %s135 = sphi 0, %s119
      %s141 = sphi 0, %s143
      %s144 = sphi 0, %s141
      %s145 = sphi 0, %s144
      %s161 = sphi 0, %s145
    $region4: #{tpu_custom_call.1} parent=1 // loop_header_branch
      %24 = sbr.rel (%p22) target = $region8
    $region5: #{tpu_custom_call.1} parent=1 // loop_body
      %s26 = ssub.s32 %s21, 1
      %s27 = ssub.s32 %s21, 2
      %s34 = sadd.s32 1, %s29
      %p35 = scmp.ge.s32.totalorder %s34, 1
      %s36 = scalar_select %p35, 0, %s34
      %s37 = sadd.s32 1, %s28
      %s38 = scalar_select %p35, %s37, %s28
      %p39 = scmp.ge.s32.totalorder %s38, 2
      %s40 = scalar_select %p39, 0, %s38
      %s41 = ssub.s32 %s28, %s40
      %s42 = ssub.s32 %s29, %s36
      %s43 = sor.u32 %s41, %s42
      %p44 = scmp.eq.s32.totalorder %s43, 0
      %s46 = sadd.s32 %s45, 1
      %s47 = scalar_select %p44, %s45, %s46
      %p50 = pneg %p44
      %p51 = scmp.eq.s32.totalorder %s21, 1
      %p52 = por %p50, %p51
      %p53 = scmp.ne.s32.totalorder %s45, %s48
      %p54 = scmp.eq.s32.totalorder %s21, 0
      %p55 = por %p53, %p54
      %p56 = scmp.ne.s32.totalorder %s45, %s48
      %p57 = scmp.eq.s32.totalorder %s26, 1
      %p58 = por %p56, %p57
      %p59 = scmp.ne.s32.totalorder %s48, %s49
      %p60 = scmp.eq.s32.totalorder %s26, 0
      %p61 = por %p59, %p60
      %p62 = scmp.ne.s32.totalorder %s48, %s49
      %p63 = scmp.eq.s32.totalorder %s27, 1
      %p64 = por %p62, %p63
      %p66 = scmp.ne.s32.totalorder %s49, %s65
      %p67 = scmp.eq.s32.totalorder %s27, 0
      %p68 = por %p66, %p67
      %s70 = sadd.s32 %s69, 1
      %p73 = scmp.eq.s32.totalorder %s21, 1
      %p74 = scmp.ne.s32.totalorder %s69, %s71
      %p75 = scmp.eq.s32.totalorder %s21, 0
      %p76 = por %p74, %p75
      %p77 = scmp.ne.s32.totalorder %s69, %s71
      %p78 = scmp.eq.s32.totalorder %s26, 1
      %p79 = por %p77, %p78
      %p80 = scmp.ne.s32.totalorder %s71, %s72
      %p81 = scmp.eq.s32.totalorder %s26, 0
      %p82 = por %p80, %p81
      %p83 = scmp.ne.s32.totalorder %s71, %s72
      %p84 = scmp.eq.s32.totalorder %s27, 1
      %p85 = por %p83, %p84
      %p87 = scmp.ne.s32.totalorder %s72, %s86
      %p88 = scmp.eq.s32.totalorder %s27, 0
      %p89 = por %p87, %p88
      %s91 = sadd.s32 %s90, 1
      %p94 = scmp.eq.s32.totalorder %s21, 1
      %p95 = scmp.ne.s32.totalorder %s90, %s92
      %p96 = scmp.eq.s32.totalorder %s21, 0
      %p97 = por %p95, %p96
      %p98 = scmp.ne.s32.totalorder %s90, %s92
      %p99 = scmp.eq.s32.totalorder %s26, 1
      %p100 = por %p98, %p99
      %p101 = scmp.ne.s32.totalorder %s92, %s93
      %p102 = scmp.eq.s32.totalorder %s26, 0
      %p103 = por %p101, %p102
      %p104 = scmp.ne.s32.totalorder %s92, %s93
      %p105 = scmp.eq.s32.totalorder %s27, 1
      %p106 = por %p104, %p105
      %p108 = scmp.ne.s32.totalorder %s93, %s107
      %p109 = scmp.eq.s32.totalorder %s27, 0
      %p110 = por %p108, %p109
      %s111 = ssub.s32 %s28, %s40
      %s112 = ssub.s32 %s29, %s36
      %s113 = sor.u32 %s111, %s112
      %p114 = scmp.eq.s32.totalorder %s113, 0
      %s116 = sadd.s32 %s115, 1
      %s117 = scalar_select %p114, %s115, %s116
      %p120 = pneg %p114
      %p121 = scmp.eq.s32.totalorder %s21, 1
      %p122 = por %p120, %p121
      %p123 = scmp.ne.s32.totalorder %s115, %s118
      %p124 = scmp.eq.s32.totalorder %s21, 0
      %p125 = por %p123, %p124
      %p126 = scmp.ne.s32.totalorder %s115, %s118
      %p127 = scmp.eq.s32.totalorder %s26, 1
      %p128 = por %p126, %p127
      %p129 = scmp.ne.s32.totalorder %s118, %s119
      %p130 = scmp.eq.s32.totalorder %s26, 0
      %p131 = por %p129, %p130
      %p132 = scmp.ne.s32.totalorder %s118, %s119
      %p133 = scmp.eq.s32.totalorder %s27, 1
      %p134 = por %p132, %p133
      %p136 = scmp.ne.s32.totalorder %s119, %s135
      %p137 = scmp.eq.s32.totalorder %s27, 0
      %p138 = por %p136, %p137
      %s139 = ssub.s32 %s28, %s40
      %p140 = scmp.eq.s32.totalorder %s139, 0
      %s142 = sadd.s32 %s141, 1
      %s143 = scalar_select %p140, %s141, %s142
      %p146 = pneg %p140
      %p147 = scmp.eq.s32.totalorder %s21, 1
      %p148 = por %p146, %p147
      %p149 = scmp.ne.s32.totalorder %s141, %s144
      %p150 = scmp.eq.s32.totalorder %s21, 0
      %p151 = por %p149, %p150
      %p152 = scmp.ne.s32.totalorder %s141, %s144
      %p153 = scmp.eq.s32.totalorder %s26, 1
      %p154 = por %p152, %p153
      %p155 = scmp.ne.s32.totalorder %s144, %s145
      %p156 = scmp.eq.s32.totalorder %s26, 0
      %p157 = por %p155, %p156
      %p158 = scmp.ne.s32.totalorder %s144, %s145
      %p159 = scmp.eq.s32.totalorder %s27, 1
      %p160 = por %p158, %p159
      %p162 = scmp.ne.s32.totalorder %s145, %s161
      %p163 = scmp.eq.s32.totalorder %s27, 0
      %p164 = por %p162, %p163
      %p165 = scmp.le.s32.totalorder 1, %s21
      %p166 = scmp.lt.s32.totalorder %s21, 3
      %p167 = pnand %p165, %p166
      %p168 = pneg %p167
      // Predicated region
      $region9: #{tpu_custom_call.1} parent=5 // pred_check
        _
      $region10: #{tpu_custom_call.1} parent=5 // pred_check_branch
        %170 = sbr.rel (%p167) target = $region12
      $region11: #{tpu_custom_call.1} parent=5 // pred_region
        %s171 = ssub.s32 %s21, 1
        // Predicated region
        $region13: #{tpu_custom_call.1} parent=11 // pred_check
          %p172 = pneg %p82
        $region14: #{tpu_custom_call.1} parent=11 // pred_check_branch
          %174 = sbr.rel (%p172) target = $region16
        $region15: #{tpu_custom_call.1} parent=11 // pred_region
          %s176 = ssub.s32 2048, 2048
          %177 = vsyncadd [#allocation6], %s176
          %s178 = sshll.u32 [#allocation5], 4
          %s179 = int_to_ptr.vmem [resolvable:$true] %s178
          %184 = dma.hbm_to_vmem [thread:$0]  %s1, 2048, %s179, [#allocation6], 128, 128, 8
        $region16: #{tpu_custom_call.1} parent=11 // pred_fallthru
          _
        // Predicated region
        $region17: #{tpu_custom_call.1} parent=11 // pred_check
          %p185 = pneg %p103
        $region18: #{tpu_custom_call.1} parent=11 // pred_check_branch
          %187 = sbr.rel (%p185) target = $region20
        $region19: #{tpu_custom_call.1} parent=11 // pred_region
          _
        $region20: #{tpu_custom_call.1} parent=11 // pred_fallthru
          _
      $region12: #{tpu_custom_call.1} parent=5 // pred_fallthru
        _
      %p188 = scmp.lt.s32.totalorder %s21, 2
      // Predicated region
      $region21: #{tpu_custom_call.1} parent=5 // pred_check
        %p189 = pneg %p188
      $region22: #{tpu_custom_call.1} parent=5 // pred_check_branch
        %191 = sbr.rel (%p189) target = $region24
      $region23: #{tpu_custom_call.1} parent=5 // pred_region
        // Predicated region
        $region25: #{tpu_custom_call.1} parent=23 // pred_check
          %p192 = pneg %p55
        $region26: #{tpu_custom_call.1} parent=23 // pred_check_branch
          %194 = sbr.rel (%p192) target = $region28
        $region27: #{tpu_custom_call.1} parent=23 // pred_region
          %s195 = sand.u32 %s45, 1
          %s196 = scalar_lea.sflag [#allocation3], %s195
          %s197 = sand.u32 %s45, 1
          %s198 = smul.addr %s197, 128
          %s199 = scalar_lea.vmem [#allocation2], %s198
          %s200 = smul.u32 16, %s29
          %s202 = ssub.s32 2048, 2048
          %203 = vsyncadd %s196, %s202
          %s204 = smul.addr %s28, 16
          %s205 = sadd.s32 %s200, %s204
          %s206 = smul.addr %s205, 128
          %s207 = scalar_lea.hbm %s0, %s206
          %s208 = sshll.u32 %s199, 4
          %s209 = int_to_ptr.vmem [resolvable:$true] %s208
          %214 = dma.hbm_to_vmem [thread:$0]  %s207, 2048, %s209, %s196, 128, 128, 8
        $region28: #{tpu_custom_call.1} parent=23 // pred_fallthru
          _
      $region24: #{tpu_custom_call.1} parent=5 // pred_fallthru
        _
      %p215 = scmp.le.s32.totalorder 1, %s21
      %p216 = scmp.lt.s32.totalorder %s21, 3
      %p217 = pnand %p215, %p216
      %p218 = pneg %p217
      // Predicated region
      $region29: #{tpu_custom_call.1} parent=5 // pred_check
        _
      $region30: #{tpu_custom_call.1} parent=5 // pred_check_branch
        %220 = sbr.rel (%p217) target = $region32
      $region31: #{tpu_custom_call.1} parent=5 // pred_region
        %s221 = ssub.s32 %s21, 1
        %s222 = sand.u32 %s48, 1
        %s223 = scalar_lea.sflag [#allocation3], %s222
        %s224 = sand.u32 %s48, 1
        %s225 = smul.addr %s224, 128
        %s226 = scalar_lea.vmem [#allocation2], %s225
        // Predicated region
        $region33: #{tpu_custom_call.1} parent=31 // pred_check
          %p227 = pneg %p61
        $region34: #{tpu_custom_call.1} parent=31 // pred_check_branch
          %229 = sbr.rel (%p227) target = $region36
        $region35: #{tpu_custom_call.1} parent=31 // pred_region
          %230 = dma.done %s223, 2048
        $region36: #{tpu_custom_call.1} parent=31 // pred_fallthru
          _
        // Predicated region
        $region37: #{tpu_custom_call.1} parent=31 // pred_check
          %p231 = pneg %p82
        $region38: #{tpu_custom_call.1} parent=31 // pred_check_branch
          %233 = sbr.rel (%p231) target = $region40
        $region39: #{tpu_custom_call.1} parent=31 // pred_region
          %234 = dma.done [#allocation6], 2048
        $region40: #{tpu_custom_call.1} parent=31 // pred_fallthru
          _
        %s235 = sand.u32 %s48, 1
        %s236 = scalar_lea.sflag [#allocation3], %s235
        %s237 = sand.u32 %s48, 1
        %s238 = smul.addr %s237, 128
        %s239 = scalar_lea.vmem [#allocation2], %s238
        %p240 = pneg %p61
        %p241 = pneg %p58
        %p242 = pneg %p82
        %p243 = pneg %p79
        %p244 = pneg %p103
        %p245 = pneg %p100
        %p246 = pneg %p131
        %p247 = pneg %p128
        %s248 = sand.u32 %s118, 1
        %s249 = scalar_lea.sflag [#allocation4], %s248
        %s250 = sand.u32 %s118, 1
        %s251 = smul.addr %s250, 8
        %s252 = scalar_lea.vmem [#allocation7], %s251
        %p253 = pneg %p157
        %p254 = pneg %p154
        %s255 = sand.u32 %s144, 1
        %s256 = scalar_lea.sflag [#allocation9], %s255
        %s257 = sand.u32 %s144, 1
        %s258 = smul.addr %s257, 2
        %s259 = scalar_lea.vmem [#allocation8], %s258
        %s260 = smul.u32 16, %s31
        %v261 = vld [vmem:[%s226] sm:$0xff]
        %v262 = vld [vmem:[%s226 + $0x8] sm:$0xff]
        %v263 = vld [vmem:[%s226 + $0x10] sm:$0xff]
        %v264 = vld [vmem:[%s226 + $0x18] sm:$0xff]
        %v265 = vld [vmem:[%s226 + $0x20] sm:$0xff]
        %v266 = vld [vmem:[%s226 + $0x28] sm:$0xff]
        %v267 = vld [vmem:[%s226 + $0x30] sm:$0xff]
        %v268 = vld [vmem:[%s226 + $0x38] sm:$0xff]
        %v269 = vld [vmem:[%s226 + $0x40] sm:$0xff]
        %v270 = vld [vmem:[%s226 + $0x48] sm:$0xff]
        %v271 = vld [vmem:[%s226 + $0x50] sm:$0xff]
        %v272 = vld [vmem:[%s226 + $0x58] sm:$0xff]
        %v273 = vld [vmem:[%s226 + $0x60] sm:$0xff]
        %v274 = vld [vmem:[%s226 + $0x68] sm:$0xff]
        %v275 = vld [vmem:[%s226 + $0x70] sm:$0xff]
        %v276 = vld [vmem:[%s226 + $0x78] sm:$0xff]
        %v277 = vld [vmem:[#allocation5] sm:$0xff]
        %v278 = vld [vmem:[#allocation5 + $0x8] sm:$0xff]
        %v279 = vld [vmem:[#allocation5 + $0x10] sm:$0xff]
        %v280 = vld [vmem:[#allocation5 + $0x18] sm:$0xff]
        %v281 = vld [vmem:[#allocation5 + $0x20] sm:$0xff]
        %v282 = vld [vmem:[#allocation5 + $0x28] sm:$0xff]
        %v283 = vld [vmem:[#allocation5 + $0x30] sm:$0xff]
        %v284 = vld [vmem:[#allocation5 + $0x38] sm:$0xff]
        %v285 = vld [vmem:[#allocation5 + $0x40] sm:$0xff]
        %v286 = vld [vmem:[#allocation5 + $0x48] sm:$0xff]
        %v287 = vld [vmem:[#allocation5 + $0x50] sm:$0xff]
        %v288 = vld [vmem:[#allocation5 + $0x58] sm:$0xff]
        %v289 = vld [vmem:[#allocation5 + $0x60] sm:$0xff]
        %v290 = vld [vmem:[#allocation5 + $0x68] sm:$0xff]
        %v291 = vld [vmem:[#allocation5 + $0x70] sm:$0xff]
        %v292 = vld [vmem:[#allocation5 + $0x78] sm:$0xff]
        %v293 = vld [vmem:[%s2] sm:$0x1]
        %v295 = vlaneseq
        %v296 = vshrl.u32 %v295, 7
        %v297 = vsub.s32 0, %v296
        %v298 = vrot.slane %v293, %v297
        %300 = vmatprep.subr.mxu0 0.0
        %301 = vmatpush1.msra.mxu0 %v292
        %302 = vmatprep.subr.mxu0 0.0
        %303 = vmatpush1.msra.mxu0 %v291
        %304 = vmatprep.subr.mxu0 0.0
        %305 = vmatpush1.msra.mxu0 %v290
        %306 = vmatprep.subr.mxu0 0.0
        %307 = vmatpush1.msra.mxu0 %v289
        %308 = vmatprep.subr.mxu0 0.0
        %309 = vmatpush1.msra.mxu0 %v288
        %310 = vmatprep.subr.mxu0 0.0
        %311 = vmatpush1.msra.mxu0 %v287
        %312 = vmatprep.subr.mxu0 0.0
        %313 = vmatpush1.msra.mxu0 %v286
        %314 = vmatprep.subr.mxu0 0.0
        %315 = vmatpush1.msra.mxu0 %v285
        %316 = vmatprep.subr.mxu0 0.0
        %317 = vmatpush1.msra.mxu0 %v284
        %318 = vmatprep.subr.mxu0 0.0
        %319 = vmatpush1.msra.mxu0 %v283
        %320 = vmatprep.subr.mxu0 0.0
        %321 = vmatpush1.msra.mxu0 %v282
        %322 = vmatprep.subr.mxu0 0.0
        %323 = vmatpush1.msra.mxu0 %v281
        %324 = vmatprep.subr.mxu0 0.0
        %325 = vmatpush1.msra.mxu0 %v280
        %326 = vmatprep.subr.mxu0 0.0
        %327 = vmatpush1.msra.mxu0 %v279
        %328 = vmatprep.subr.mxu0 0.0
        %329 = vmatpush1.msra.mxu0 %v278
        %330 = vmatprep.subr.mxu0 0.0
        %331 = vmatpush1.msra.mxu0 %v277
        %332 = vmatprep.subr.mxu0 0.0
        %333 = vmatpush2.msra.mxu0 0.0
        %334 = vmatprep.subr.mxu0 0.0
        %335 = vmatpush2.msra.mxu0 0.0
        %336 = vmatprep.subr.mxu0 0.0
        %337 = vmatpush2.msra.mxu0 0.0
        %338 = vmatprep.subr.mxu0 0.0
        %339 = vmatpush2.msra.mxu0 0.0
        %340 = vmatprep.subr.mxu0 0.0
        %341 = vmatpush2.msra.mxu0 0.0
        %342 = vmatprep.subr.mxu0 0.0
        %343 = vmatpush2.msra.mxu0 0.0
        %344 = vmatprep.subr.mxu0 0.0
        %345 = vmatpush2.msra.mxu0 0.0
        %346 = vmatprep.subr.mxu0 0.0
        %347 = vmatpush2.msra.mxu0 0.0
        %348 = vmatprep.subr.mxu0 0.0
        %349 = vmatpush2.msra.mxu0 0.0
        %350 = vmatprep.subr.mxu0 0.0
        %351 = vmatpush2.msra.mxu0 0.0
        %352 = vmatprep.subr.mxu0 0.0
        %353 = vmatpush2.msra.mxu0 0.0
        %354 = vmatprep.subr.mxu0 0.0
        %355 = vmatpush2.msra.mxu0 0.0
        %356 = vmatprep.subr.mxu0 0.0
        %357 = vmatpush2.msra.mxu0 0.0
        %358 = vmatprep.subr.mxu0 0.0
        %359 = vmatpush2.msra.mxu0 0.0
        %360 = vmatprep.subr.mxu0 0.0
        %361 = vmatpush2.msra.mxu0 0.0
        %362 = vmatprep.subr.mxu0 0.0
        %363 = vmatpush2.msra.mxu0 0.0
        %364 = vmatprep.mubr.f32.mxu0 0.0
        %365 = vmatmul.mubr.f32.gmra.mxu0 %v261
        %v366 = vpop.f32.mrf.mxu0
        %v367 = vadd.f32 %v298, %v366
        %v368 = vpop.f32.mrf.mxu0
        %369 = vmatprep.mubr.f32.mxu0 0.0
        %370 = vmatmul.mubr.f32.gmra.mxu0 %v262
        %v371 = vpop.f32.mrf.mxu0
        %v372 = vadd.f32 %v298, %v371
        %v373 = vpop.f32.mrf.mxu0
        %374 = vmatprep.mubr.f32.mxu0 0.0
        %375 = vmatmul.mubr.f32.gmra.mxu0 %v263
        %v376 = vpop.f32.mrf.mxu0
        %v377 = vadd.f32 %v298, %v376
        %v378 = vpop.f32.mrf.mxu0
        %379 = vmatprep.mubr.f32.mxu0 0.0
        %380 = vmatmul.mubr.f32.gmra.mxu0 %v264
        %v381 = vpop.f32.mrf.mxu0
        %v382 = vadd.f32 %v298, %v381
        %v383 = vpop.f32.mrf.mxu0
        %384 = vmatprep.mubr.f32.mxu0 0.0
        %385 = vmatmul.mubr.f32.gmra.mxu0 %v265
        %v386 = vpop.f32.mrf.mxu0
        %v387 = vadd.f32 %v298, %v386
        %v388 = vpop.f32.mrf.mxu0
        %389 = vmatprep.mubr.f32.mxu0 0.0
        %390 = vmatmul.mubr.f32.gmra.mxu0 %v266
        %v391 = vpop.f32.mrf.mxu0
        %v392 = vadd.f32 %v298, %v391
        %v393 = vpop.f32.mrf.mxu0
        %394 = vmatprep.mubr.f32.mxu0 0.0
        %395 = vmatmul.mubr.f32.gmra.mxu0 %v267
        %v396 = vpop.f32.mrf.mxu0
        %v397 = vadd.f32 %v298, %v396
        %v398 = vpop.f32.mrf.mxu0
        %399 = vmatprep.mubr.f32.mxu0 0.0
        %400 = vmatmul.mubr.f32.gmra.mxu0 %v268
        %v401 = vpop.f32.mrf.mxu0
        %v402 = vadd.f32 %v298, %v401
        %v403 = vpop.f32.mrf.mxu0
        %404 = vmatprep.mubr.f32.mxu0 0.0
        %405 = vmatmul.mubr.f32.gmra.mxu0 %v269
        %v406 = vpop.f32.mrf.mxu0
        %v407 = vadd.f32 %v298, %v406
        %v408 = vpop.f32.mrf.mxu0
        %409 = vmatprep.mubr.f32.mxu0 0.0
        %410 = vmatmul.mubr.f32.gmra.mxu0 %v270
        %v411 = vpop.f32.mrf.mxu0
        %v412 = vadd.f32 %v298, %v411
        %v413 = vpop.f32.mrf.mxu0
        %414 = vmatprep.mubr.f32.mxu0 0.0
        %415 = vmatmul.mubr.f32.gmra.mxu0 %v271
        %v416 = vpop.f32.mrf.mxu0
        %v417 = vadd.f32 %v298, %v416
        %v418 = vpop.f32.mrf.mxu0
        %419 = vmatprep.mubr.f32.mxu0 0.0
        %420 = vmatmul.mubr.f32.gmra.mxu0 %v272
        %v421 = vpop.f32.mrf.mxu0
        %v422 = vadd.f32 %v298, %v421
        %v423 = vpop.f32.mrf.mxu0
        %424 = vmatprep.mubr.f32.mxu0 0.0
        %425 = vmatmul.mubr.f32.gmra.mxu0 %v273
        %v426 = vpop.f32.mrf.mxu0
        %v427 = vadd.f32 %v298, %v426
        %v428 = vpop.f32.mrf.mxu0
        %429 = vmatprep.mubr.f32.mxu0 0.0
        %430 = vmatmul.mubr.f32.gmra.mxu0 %v274
        %v431 = vpop.f32.mrf.mxu0
        %v432 = vadd.f32 %v298, %v431
        %v433 = vpop.f32.mrf.mxu0
        %434 = vmatprep.mubr.f32.mxu0 0.0
        %435 = vmatmul.mubr.f32.gmra.mxu0 %v275
        %v436 = vpop.f32.mrf.mxu0
        %v437 = vadd.f32 %v298, %v436
        %v438 = vpop.f32.mrf.mxu0
        %439 = vmatprep.mubr.f32.mxu0 0.0
        %440 = vmatmul.mubr.f32.gmra.mxu0 %v276
        %v441 = vpop.f32.mrf.mxu0
        %v442 = vadd.f32 %v298, %v441
        %v443 = vpop.f32.mrf.mxu0
        %444 = vdwg.mxu0
        %v445 = vadd.f32 %v367, %v372
        %v446 = vadd.f32 %v445, %v377
        %v447 = vadd.f32 %v446, %v382
        %v448 = vadd.f32 %v447, %v387
        %v449 = vadd.f32 %v448, %v392
        %v450 = vadd.f32 %v449, %v397
        %v451 = vadd.f32 %v450, %v402
        %v452 = vadd.f32 %v451, %v407
        %v453 = vadd.f32 %v452, %v412
        %v454 = vadd.f32 %v453, %v417
        %v455 = vadd.f32 %v454, %v422
        %v456 = vadd.f32 %v455, %v427
        %v457 = vadd.f32 %v456, %v432
        %v458 = vadd.f32 %v457, %v437
        %v459 = vadd.f32 %v458, %v442
        %v460 = vrot.slane %v459, 4
        %v461 = vadd.f32 %v459, %v460
        %v462 = vrot.slane %v461, 2
        %v463 = vadd.f32 %v461, %v462
        %v464 = vrot.slane %v463, 1
        %v465 = vadd.f32 %v463, %v464
        %v466 = vmul.f32 %v367, %v367
        %v467 = vmul.f32 %v372, %v372
        %v468 = vmul.f32 %v377, %v377
        %v469 = vmul.f32 %v382, %v382
        %v470 = vmul.f32 %v387, %v387
        %v471 = vmul.f32 %v392, %v392
        %v472 = vmul.f32 %v397, %v397
        %v473 = vmul.f32 %v402, %v402
        %v474 = vmul.f32 %v407, %v407
        %v475 = vmul.f32 %v412, %v412
        %v476 = vmul.f32 %v417, %v417
        %v477 = vmul.f32 %v422, %v422
        %v478 = vmul.f32 %v427, %v427
        %v479 = vmul.f32 %v432, %v432
        %v480 = vmul.f32 %v437, %v437
        %v481 = vmul.f32 %v442, %v442
        %v482 = vadd.f32 %v466, %v467
        %v483 = vadd.f32 %v482, %v468
        %v484 = vadd.f32 %v483, %v469
        %v485 = vadd.f32 %v484, %v470
        %v486 = vadd.f32 %v485, %v471
        %v487 = vadd.f32 %v486, %v472
        %v488 = vadd.f32 %v487, %v473
        %v489 = vadd.f32 %v488, %v474
        %v490 = vadd.f32 %v489, %v475
        %v491 = vadd.f32 %v490, %v476
        %v492 = vadd.f32 %v491, %v477
        %v493 = vadd.f32 %v492, %v478
        %v494 = vadd.f32 %v493, %v479
        %v495 = vadd.f32 %v494, %v480
        %v496 = vadd.f32 %v495, %v481
        %v497 = vrot.slane %v496, 4
        %v498 = vadd.f32 %v496, %v497
        %v499 = vrot.slane %v498, 2
        %v500 = vadd.f32 %v498, %v499
        %v501 = vrot.slane %v500, 1
        %v502 = vadd.f32 %v500, %v501
        %p503 = scmp.eq.s32.totalorder %s31, 0
        // Predicated region
        $region41: #{tpu_custom_call.1} parent=31 // pred_check
          %p504 = pneg %p503
        $region42: #{tpu_custom_call.1} parent=31 // pred_check_branch
          %506 = sbr.rel (%p504) target = $region44
        $region43: #{tpu_custom_call.1} parent=31 // pred_region
          %507 = vst [vmem:[%s259] sm:$0x3] 0.0
        $region44: #{tpu_custom_call.1} parent=31 // pred_fallthru
          _
        %v508 = vld [vmem:[%s259] sm:$0x3]
        %vm509 = vcmask 1040384
        %v510 = vsel %vm509, %v465, %v502
        %v511 = vadd.f32 %v508, %v510
        %512 = vst [vmem:[%s259] sm:$0x3] %v511
        %513 = vxpose.xlu0.b32.start [1/16] %v367, 128
        %514 = vxpose.xlu0.b32.cont [2/16] %v372, 128
        %515 = vxpose.xlu0.b32.cont [3/16] %v377, 128
        %516 = vxpose.xlu0.b32.cont [4/16] %v382, 128
        %517 = vxpose.xlu0.b32.cont [5/16] %v387, 128
        %518 = vxpose.xlu0.b32.cont [6/16] %v392, 128
        %519 = vxpose.xlu0.b32.cont [7/16] %v397, 128
        %520 = vxpose.xlu0.b32.cont [8/16] %v402, 128
        %521 = vxpose.xlu0.b32.cont [9/16] %v407, 128
        %522 = vxpose.xlu0.b32.cont [10/16] %v412, 128
        %523 = vxpose.xlu0.b32.cont [11/16] %v417, 128
        %524 = vxpose.xlu0.b32.cont [12/16] %v422, 128
        %525 = vxpose.xlu0.b32.cont [13/16] %v427, 128
        %526 = vxpose.xlu0.b32.cont [14/16] %v432, 128
        %527 = vxpose.xlu0.b32.cont [15/16] %v437, 128
        %528 = vxpose.xlu0.b32.end [16/16] %v442, 128
        %v529 = vpop.trf.xlu0
        %v530 = vpop.trf.xlu0
        %v531 = vpop.trf.xlu0
        %v532 = vpop.trf.xlu0
        %v533 = vpop.trf.xlu0
        %v534 = vpop.trf.xlu0
        %v535 = vpop.trf.xlu0
        %v536 = vpop.trf.xlu0
        %v537 = vpop.trf.xlu0
        %v538 = vpop.trf.xlu0
        %v539 = vpop.trf.xlu0
        %v540 = vpop.trf.xlu0
        %v541 = vpop.trf.xlu0
        %v542 = vpop.trf.xlu0
        %v543 = vpop.trf.xlu0
        %v544 = vpop.trf.xlu0
        %545 = vst [vmem:[%s252] sm:$0xff] %v529
        %s546 = sand.u32 %s118, 1
        %s547 = scalar_lea.sflag [#allocation4], %s546
        %s548 = sand.u32 %s118, 1
        %s549 = smul.addr %s548, 8
        %s550 = scalar_lea.vmem [#allocation7], %s549
        %s551 = sand.u32 %s144, 1
        %s552 = scalar_lea.sflag [#allocation9], %s551
        %s553 = sand.u32 %s144, 1
        %s554 = smul.addr %s553, 2
        %s555 = scalar_lea.vmem [#allocation8], %s554
        // Predicated region
        $region45: #{tpu_custom_call.1} parent=31 // pred_check
          %p556 = pneg %p128
        $region46: #{tpu_custom_call.1} parent=31 // pred_check_branch
          %558 = sbr.rel (%p556) target = $region48
        $region47: #{tpu_custom_call.1} parent=31 // pred_region
          %s560 = ssub.s32 128, 128
          %561 = vsyncadd %s547, %s560
          %s562 = sadd.s32 %s31, %s30
          %s563 = smul.addr %s562, 128
          %s564 = scalar_lea.hbm %s3, %s563
          %s566 = sshll.u32 %s550, 4
          %s567 = int_to_ptr.vmem [resolvable:$true] %s566
          %569 = dma.vmem_to_hbm [thread:$0]  %s567, 128, %s564, %s547
        $region48: #{tpu_custom_call.1} parent=31 // pred_fallthru
          _
        // Predicated region
        $region49: #{tpu_custom_call.1} parent=31 // pred_check
          %p570 = pneg %p154
        $region50: #{tpu_custom_call.1} parent=31 // pred_check_branch
          %572 = sbr.rel (%p570) target = $region52
        $region51: #{tpu_custom_call.1} parent=31 // pred_region
          %s574 = ssub.s32 32, 32
          %575 = vsyncadd %s552, %s574
          %s576 = smul.addr %s30, 32
          %s577 = scalar_lea.hbm %s4, %s576
          %s579 = sshll.u32 %s555, 4
          %s580 = int_to_ptr.vmem [resolvable:$true] %s579
          %582 = dma.vmem_to_hbm [thread:$0]  %s580, 32, %s577, %s552
        $region52: #{tpu_custom_call.1} parent=31 // pred_fallthru
          _
      $region32: #{tpu_custom_call.1} parent=5 // pred_fallthru
        _
      %p583 = scmp.le.s32.totalorder 2, %s21
      // Predicated region
      $region53: #{tpu_custom_call.1} parent=5 // pred_check
        %p584 = pneg %p583
      $region54: #{tpu_custom_call.1} parent=5 // pred_check_branch
        %586 = sbr.rel (%p584) target = $region56
      $region55: #{tpu_custom_call.1} parent=5 // pred_region
        %s587 = ssub.s32 %s21, 2
        // Predicated region
        $region57: #{tpu_custom_call.1} parent=55 // pred_check
          %p588 = pneg %p134
        $region58: #{tpu_custom_call.1} parent=55 // pred_check_branch
          %590 = sbr.rel (%p588) target = $region60
        $region59: #{tpu_custom_call.1} parent=55 // pred_region
          %s591 = sand.u32 %s119, 1
          %s592 = scalar_lea.sflag [#allocation4], %s591
          %s593 = sand.u32 %s119, 1
          %s594 = smul.addr %s593, 8
          %s595 = scalar_lea.vmem [#allocation7], %s594
          %596 = dma.done %s592, 128
        $region60: #{tpu_custom_call.1} parent=55 // pred_fallthru
          _
        // Predicated region
        $region61: #{tpu_custom_call.1} parent=55 // pred_check
          %p597 = pneg %p160
        $region62: #{tpu_custom_call.1} parent=55 // pred_check_branch
          %599 = sbr.rel (%p597) target = $region64
        $region63: #{tpu_custom_call.1} parent=55 // pred_region
          %s600 = sand.u32 %s145, 1
          %s601 = scalar_lea.sflag [#allocation9], %s600
          %s602 = sand.u32 %s145, 1
          %s603 = smul.addr %s602, 2
          %s604 = scalar_lea.vmem [#allocation8], %s603
          %605 = dma.done %s601, 32
        $region64: #{tpu_custom_call.1} parent=55 // pred_fallthru
          _
      $region56: #{tpu_custom_call.1} parent=5 // pred_fallthru
        _
    $region6: #{tpu_custom_call.1} parent=1 // loop_footer
      %s25 = sadd.s32 1, %s21
    $region7: #{tpu_custom_call.1} parent=1 // loop_footer_branch
      %20 = sbr.rel target = $region3
    $region8: #{tpu_custom_call.1} parent=1 // loop_exit
      _
    %606 = vsyncpa [#allocation3], 1
    %s607 = scalar_lea.sflag [#allocation3], 1
    %608 = vsyncpa %s607, 1
    %609 = vsyncpa [#allocation6], 1
    %610 = vsyncpa [#allocation4], 1
    %s611 = scalar_lea.sflag [#allocation4], 1
    %612 = vsyncpa %s611, 1
    %613 = vsyncpa [#allocation9], 1
    %s614 = scalar_lea.sflag [#allocation9], 1
    %615 = vsyncpa %s614, 1

</llo_original>
